<compile_context>
chip_gen: v7x
topology: tpu7x:2x2x1
jax: 0.10.0
libtpu: 0.0.40
codegen_flags: <defaults>
</compile_context>

<pallas_src>
import jax
import jax.numpy as jnp
from jax.experimental import pallas as pl
from jax.experimental.pallas import tpu as pltpu


_COL_CANDIDATES = (1024, 896, 768, 640, 512, 384, 256, 128)  # lane-dense widths
_MAX_ROW_TILE = 1024            # 1024x1024 f32 tile = 4 MiB; ~18 MiB double-buffered
_VMEM_LIMIT_BYTES = 32 << 20    # above v5e's 16 MiB scoped default, << physical on all gens
_XLA_FALLBACK_ELEMS = 256 * 1024  # tiny tensors: plain XLA multiply (fusion-friendly)


def _round_up(a: int, b: int) -> int:
    return ((a + b - 1) // b) * b


def _pick_cols(total: int) -> int:
    """Largest lane-dense width that divides the element count (no tail)."""
    for c in _COL_CANDIDATES:
        if total % c == 0:
            return c
    return _COL_CANDIDATES[0]   # 1024; the < cols remainder goes to the XLA tail path


def _pick_row_tile(rows: int) -> int:
    # Multiple of 32 so int8 mask blocks align to their (32,128) packed tile
    # (and bf16 x to (16,128)).
    tr = min(_MAX_ROW_TILE, _round_up(rows, 32))
    # Ensure >= 2 balanced tiles when rows allow, so v7x's two TensorCores
    # both get work under dimension_semantics=("parallel",).
    if pl.cdiv(rows, tr) < 2 and rows > 32:
        tr = max(32, _round_up(pl.cdiv(rows, 2), 32))
    return tr


def _mask_mul_kernel(x_ref, m_ref, o_ref):
    # Pure load-multiply-store (HBM-bandwidth bound).  Mask arrives as int8
    # (4x less mask traffic than f32) and is cast on the VPU.
    o_ref[...] = x_ref[...] * m_ref[...].astype(x_ref.dtype)


def _mask_mul_2d(x2d: jax.Array, m2d: jax.Array) -> jax.Array:
    """y2d = x2d * m2d for a lane-dense (rows, cols) slab; m2d is int8."""
    rows, cols = x2d.shape
    tr = _pick_row_tile(rows)
    itemsize = jnp.dtype(x2d.dtype).itemsize
    nelem = rows * cols
    return pl.pallas_call(
        _mask_mul_kernel,
        out_shape=jax.ShapeDtypeStruct((rows, cols), x2d.dtype),
        grid=(pl.cdiv(rows, tr),),   # partial edge block handled by Pallas masking
        in_specs=[
            pl.BlockSpec((tr, cols), lambda i: (i, 0)),
            pl.BlockSpec((tr, cols), lambda i: (i, 0)),
        ],
        out_specs=pl.BlockSpec((tr, cols), lambda i: (i, 0)),
        compiler_params=pltpu.CompilerParams(
            dimension_semantics=("parallel",),
            vmem_limit_bytes=_VMEM_LIMIT_BYTES,
        ),
        cost_estimate=pl.CostEstimate(
            flops=nelem,
            transcendentals=0,
            bytes_accessed=nelem * (2 * itemsize + 1),  # x + y + int8 mask
        ),
    )(x2d, m2d)


class Sparsifier:
    """JAX/Pallas port of the Ternary-ViT Sparsifier base class."""

    def __init__(self, **kwargs):
        self._mask_shape = None    # logical mask/input shape
        self._mask_small = None    # int8, original shape      (XLA fallback path)
        self._mask_prefix = None   # int8 (rows, cols) slab    (Pallas path)
        self._mask_tail = None     # int8 (<cols,) remainder   (XLA tail)
        self._rows = None
        self._cols = None

    def init_from(self, x, *args, **kwargs):
        # base class: no-op
        pass

    def update_mask(self, x, sparsity=None):
        # base class: no-op -> mask stays unset (identity semantics)
        pass

    def set_mask(self, mask):
        """Install a binary mask; pre-layout it once for the kernel hot path."""
        # TODO(synk): int8 storage assumes a binary {0,1} mask (true for the
        # Ternary-ViT subclasses); soft/scaled float masks would be truncated.
        m = jnp.asarray(mask, dtype=jnp.int8)
        self._mask_shape = m.shape
        total = m.size
        if total < _XLA_FALLBACK_ELEMS:
            self._mask_small = m
            self._mask_prefix = None
            self._mask_tail = None
            self._rows = self._cols = None
            return
        self._mask_small = None
        cols = _pick_cols(total)
        rows = total // cols
        m_flat = m.reshape(-1)
        self._rows, self._cols = rows, cols
        self._mask_prefix = m_flat[: rows * cols].reshape(rows, cols)
        self._mask_tail = m_flat[rows * cols:]   # size 0 when cols divides total

    def forward(self, x):
        if self._mask_shape is None:
            # Base-class semantics: update_mask never installs a mask ->
            # nothing is sparsified.  Identity: no kernel, zero extra HBM
            # traffic.
            # TODO(synk): PyTorch base class forward raises NotImplementedError;
            # we return the canonical no-mask identity instead.
            return x
        assert self._mask_shape == x.shape, (
            f"mask shape {self._mask_shape} != input shape {x.shape}")

        if self._mask_small is not None:
            # Tiny tensors: let XLA fuse the multiply with neighbours.
            return x * self._mask_small.astype(x.dtype)

        rows, cols = self._rows, self._cols
        prefix = rows * cols
        x_flat = x.reshape(-1)

        if self._mask_tail.size == 0:
            # Common case: reshape is a free bitcast, whole tensor through the kernel.
            y2d = _mask_mul_2d(x_flat.reshape(rows, cols), self._mask_prefix)
            return y2d.reshape(x.shape)

        # Rare non-128-divisible case: kernel on the prefix, XLA on the tail.
        yp = _mask_mul_2d(x_flat[:prefix].reshape(rows, cols), self._mask_prefix)
        y_tail = x_flat[prefix:] * self._mask_tail.astype(x.dtype)
        return jnp.concatenate([yp.reshape(-1), y_tail]).reshape(x.shape)

    __call__ = forward


if __name__ == "__main__":
    key = jax.random.PRNGKey(0)
    k1, k2, k3 = jax.random.split(key, 3)

    # --- primary small NCHW input consistent with the module ---
    x_small = jax.random.normal(k1, (2, 4, 16, 16), dtype=jnp.float32)

    sp = Sparsifier()
    sp.init_from(x_small)
    sp.update_mask(x_small, sparsity=None)   # base-class no-op

    # 1) Base-class path: identity short-circuit (no mask set, no kernel launch).
    y_id = jax.block_until_ready(sp(x_small))
    assert y_id.shape == x_small.shape and y_id.dtype == x_small.dtype
    assert bool(jnp.array_equal(y_id, x_small)), "base-class Sparsifier must be identity"

    # 2) Small masked path (below threshold -> fused XLA multiply).
    m_small = (jnp.arange(x_small.size, dtype=jnp.int32).reshape(x_small.shape) % 2
               ).astype(jnp.int8)
    sp.set_mask(m_small)
    y_small = jax.block_until_ready(sp(x_small))
    assert bool(jnp.allclose(y_small, x_small * m_small.astype(x_small.dtype)))

    # 3) Pallas hot path: element count divisible by the lane width (no tail).
    x_med = jax.random.normal(k2, (2, 32, 64, 64), dtype=jnp.float32)   # 262144 elems
    m_med = (jax.random.uniform(k3, x_med.shape) > 0.5).astype(jnp.int8)
    sp_med = Sparsifier()
    sp_med.set_mask(m_med)
    y_med = jax.block_until_ready(sp_med(x_med))
    assert y_med.shape == x_med.shape and y_med.dtype == x_med.dtype
    assert bool(jnp.allclose(y_med, x_med * m_med.astype(x_med.dtype))), \
        "Pallas mask-multiply mismatch (divisible case)"

    # 4) Pallas path with a non-128-divisible element count
    #    (partial edge block in the grid + XLA tail).
    x_odd = jax.random.normal(k2, (3, 7, 101, 127), dtype=jnp.float32)  # 269367 elems
    m_odd = (jnp.arange(x_odd.size, dtype=jnp.int32).reshape(x_odd.shape) % 3 != 0
             ).astype(jnp.int8)
    sp_odd = Sparsifier()
    sp_odd.set_mask(m_odd)
    y_odd = jax.block_until_ready(sp_odd(x_odd))
    assert bool(jnp.allclose(y_odd, x_odd * m_odd.astype(x_odd.dtype))), \
        "Pallas mask-multiply mismatch (prefix+tail case)"

    print("KERNEL_OK")
</pallas_src>

<mosaic_0001>
module attributes {stable_mosaic.version = 11 : i64} {
  func.func @_mask_mul_kernel(%arg0: i32, %arg1: memref<128x1024xf32, #tpu.memory_space<vmem>>, %arg2: memref<128x1024xi8, #tpu.memory_space<vmem>>, %arg3: memref<128x1024xf32, #tpu.memory_space<vmem>>) attributes {dimension_semantics = [#tpu.dimension_semantics<parallel>], iteration_bounds = array<i64: 2>, scalar_prefetch = 0 : i64, scratch_operands = 0 : i64, tpu.core_type = #tpu.core_type<tc>, window_params = [{transform_indices = @transform_0, window_bounds = array<i64: 128, 1024>}, {transform_indices = @transform_1, window_bounds = array<i64: 128, 1024>}, {transform_indices = @transform_2, window_bounds = array<i64: 128, 1024>}]} {
    %c0 = arith.constant 0 : index
    %c0_0 = arith.constant 0 : index
    %0 = vector.load %arg1[%c0, %c0_0] : memref<128x1024xf32, #tpu.memory_space<vmem>>, vector<128x1024xf32>
    %c0_1 = arith.constant 0 : index
    %c0_2 = arith.constant 0 : index
    %1 = vector.load %arg2[%c0_1, %c0_2] : memref<128x1024xi8, #tpu.memory_space<vmem>>, vector<128x1024xi8>
    %2 = arith.sitofp %1 : vector<128x1024xi8> to vector<128x1024xf32>
    %3 = arith.mulf %0, %2 : vector<128x1024xf32>
    %c0_3 = arith.constant 0 : index
    %c0_4 = arith.constant 0 : index
    %4 = vector.load %arg3[%c0_3, %c0_4] : memref<128x1024xf32, #tpu.memory_space<vmem>>, vector<128x1024xf32>
    tpu.vector_store %arg3[%c0_3, %c0_4], %3 {strides = array<i32>} : memref<128x1024xf32, #tpu.memory_space<vmem>>, vector<128x1024xf32>,
    return
  }
  func.func @transform_0(%arg0: i32) -> (i32, i32) {
    %c0_i32 = arith.constant 0 : i32
    %c0_i32_0 = arith.constant 0 : i32
    return %arg0, %c0_i32 : i32, i32
  }
  func.func @transform_1(%arg0: i32) -> (i32, i32) {
    %c0_i32 = arith.constant 0 : i32
    %c0_i32_0 = arith.constant 0 : i32
    return %arg0, %c0_i32 : i32, i32
  }
  func.func @transform_2(%arg0: i32) -> (i32, i32) {
    %c0_i32 = arith.constant 0 : i32
    %c0_i32_0 = arith.constant 0 : i32
    return %arg0, %c0_i32 : i32, i32
  }
}

</mosaic_0001>

<llo_original>
// kernel: tpu_custom_call.1
$region0: #{tpu_custom_call.1}
  #allocation0 [shape = 'u32[]', space=smem, size = 0x4, offset = 0x4, fixed_abs, tag = 'smem constant byte address 0x4 - core index']
  #allocation1 [shape = 'u32[144,128]{1,0:T(1,128)}', space=vmem, size = 0x12000, scoped, tag = 'internal scratch']
  %s0 = inlined_call_operand.hbm [shape: f32[256,1024], index: 0, kind: input, shape index: {}]
  %s1 = inlined_call_operand.hbm [shape: s8[256,1024], index: 1, kind: input, shape index: {}]
  %s2 = inlined_call_operand.hbm [shape: f32[256,1024], index: 2, kind: output, shape index: {}]
  %s3 = sld [smem:[#allocation0]]
  $region49: #{tpu_custom_call.1} parent=0
    _
  %s5 = ssub.s32 1, %s3
  %s6 = scalar_select 0, %s5, %s3
  $region1: #{tpu_custom_call.1} parent=0
    #allocation2 [shape = 'u8[1048576]{0}', space=vmem, size = 0x100000, scoped, tag = 'input window, operand 0']
    #allocation3 [shape = 's32[2]{0}', space=sflag, size = 0x8, scoped, tag = 'scoped memory for tpu_custom_call.1']
    #allocation4 [shape = 's32[2]{0}', space=sflag, size = 0x8, scoped, tag = 'scoped memory for tpu_custom_call.1']
    #allocation5 [shape = 'u8[262144]{0}', space=vmem, size = 0x40000, scoped, tag = 'input window, operand 1']
    #allocation6 [shape = 's32[2]{0}', space=sflag, size = 0x8, scoped, tag = 'scoped memory for tpu_custom_call.1']
    #allocation7 [shape = 'u8[1048576]{0}', space=vmem, size = 0x100000, scoped, tag = 'output window, operand 0']
    %7 = vsyncpa [#allocation3], 0
    %s8 = scalar_lea.sflag [#allocation3], 1
    %9 = vsyncpa %s8, 0
    %10 = vsyncpa [#allocation6], 0
    %s11 = scalar_lea.sflag [#allocation6], 1
    %12 = vsyncpa %s11, 0
    %13 = vsyncpa [#allocation4], 0
    %s14 = scalar_lea.sflag [#allocation4], 1
    %15 = vsyncpa %s14, 0
    loop: start=0, step=1, limit=4
    $region2: #{tpu_custom_call.1} parent=1 // loop_pre_header
      _
    $region3: #{tpu_custom_call.1} parent=1 // loop_header
      %s17 = sphi 0, %s21
      %p18 = scmp.ge.s32.totalorder %s17, 4
      %s27 = sphi 0, %s29
      %s30 = sphi 0, %s27
      %s31 = sphi 0, %s30
      %s47 = sphi 0, %s31
      %s53 = sphi 0, %s55
      %s56 = sphi 0, %s53
      %s57 = sphi 0, %s56
      %s73 = sphi 0, %s57
      %s79 = sphi 0, %s81
      %s82 = sphi 0, %s79
      %s83 = sphi 0, %s82
      %s99 = sphi 0, %s83
    $region4: #{tpu_custom_call.1} parent=1 // loop_header_branch
      %20 = sbr.rel (%p18) target = $region8
    $region5: #{tpu_custom_call.1} parent=1 // loop_body
      %s22 = ssub.s32 %s17, 1
      %s23 = ssub.s32 %s17, 2
      %s24 = sadd.s32 %s17, 1
      %s25 = ssub.s32 %s17, %s24
      %p26 = scmp.eq.s32.totalorder %s25, 0
      %s28 = sadd.s32 %s27, 1
      %s29 = scalar_select %p26, %s27, %s28
      %p32 = pneg %p26
      %p33 = scmp.eq.s32.totalorder %s17, 1
      %p34 = por %p32, %p33
      %p35 = scmp.ne.s32.totalorder %s27, %s30
      %p36 = scmp.eq.s32.totalorder %s17, 0
      %p37 = por %p35, %p36
      %p38 = scmp.ne.s32.totalorder %s27, %s30
      %p39 = scmp.eq.s32.totalorder %s22, 1
      %p40 = por %p38, %p39
      %p41 = scmp.ne.s32.totalorder %s30, %s31
      %p42 = scmp.eq.s32.totalorder %s22, 0
      %p43 = por %p41, %p42
      %p44 = scmp.ne.s32.totalorder %s30, %s31
      %p45 = scmp.eq.s32.totalorder %s23, 1
      %p46 = por %p44, %p45
      %p48 = scmp.ne.s32.totalorder %s31, %s47
      %p49 = scmp.eq.s32.totalorder %s23, 0
      %p50 = por %p48, %p49
      %s51 = ssub.s32 %s17, %s24
      %p52 = scmp.eq.s32.totalorder %s51, 0
      %s54 = sadd.s32 %s53, 1
      %s55 = scalar_select %p52, %s53, %s54
      %p58 = pneg %p52
      %p59 = scmp.eq.s32.totalorder %s17, 1
      %p60 = por %p58, %p59
      %p61 = scmp.ne.s32.totalorder %s53, %s56
      %p62 = scmp.eq.s32.totalorder %s17, 0
      %p63 = por %p61, %p62
      %p64 = scmp.ne.s32.totalorder %s53, %s56
      %p65 = scmp.eq.s32.totalorder %s22, 1
      %p66 = por %p64, %p65
      %p67 = scmp.ne.s32.totalorder %s56, %s57
      %p68 = scmp.eq.s32.totalorder %s22, 0
      %p69 = por %p67, %p68
      %p70 = scmp.ne.s32.totalorder %s56, %s57
      %p71 = scmp.eq.s32.totalorder %s23, 1
      %p72 = por %p70, %p71
      %p74 = scmp.ne.s32.totalorder %s57, %s73
      %p75 = scmp.eq.s32.totalorder %s23, 0
      %p76 = por %p74, %p75
      %s77 = ssub.s32 %s17, %s24
      %p78 = scmp.eq.s32.totalorder %s77, 0
      %s80 = sadd.s32 %s79, 1
      %s81 = scalar_select %p78, %s79, %s80
      %p84 = pneg %p78
      %p85 = scmp.eq.s32.totalorder %s17, 1
      %p86 = por %p84, %p85
      %p87 = scmp.ne.s32.totalorder %s79, %s82
      %p88 = scmp.eq.s32.totalorder %s17, 0
      %p89 = por %p87, %p88
      %p90 = scmp.ne.s32.totalorder %s79, %s82
      %p91 = scmp.eq.s32.totalorder %s22, 1
      %p92 = por %p90, %p91
      %p93 = scmp.ne.s32.totalorder %s82, %s83
      %p94 = scmp.eq.s32.totalorder %s22, 0
      %p95 = por %p93, %p94
      %p96 = scmp.ne.s32.totalorder %s82, %s83
      %p97 = scmp.eq.s32.totalorder %s23, 1
      %p98 = por %p96, %p97
      %p100 = scmp.ne.s32.totalorder %s83, %s99
      %p101 = scmp.eq.s32.totalorder %s23, 0
      %p102 = por %p100, %p101
      %p103 = scmp.le.s32.totalorder 1, %s17
      %p104 = scmp.lt.s32.totalorder %s17, 3
      %p105 = pnand %p103, %p104
      %p106 = pneg %p105
      // Predicated region
      $region9: #{tpu_custom_call.1} parent=5 // pred_check
        _
      $region10: #{tpu_custom_call.1} parent=5 // pred_check_branch
        %108 = sbr.rel (%p105) target = $region12
      $region11: #{tpu_custom_call.1} parent=5 // pred_region
        %s109 = ssub.s32 %s17, 1
      $region12: #{tpu_custom_call.1} parent=5 // pred_fallthru
        _
      %p110 = scmp.lt.s32.totalorder %s17, 2
      // Predicated region
      $region13: #{tpu_custom_call.1} parent=5 // pred_check
        %p111 = pneg %p110
      $region14: #{tpu_custom_call.1} parent=5 // pred_check_branch
        %113 = sbr.rel (%p111) target = $region16
      $region15: #{tpu_custom_call.1} parent=5 // pred_region
        // Predicated region
        $region17: #{tpu_custom_call.1} parent=15 // pred_check
          %p114 = pneg %p37
        $region18: #{tpu_custom_call.1} parent=15 // pred_check_branch
          %116 = sbr.rel (%p114) target = $region20
        $region19: #{tpu_custom_call.1} parent=15 // pred_region
          %s117 = sand.u32 %s27, 1
          %s118 = scalar_lea.sflag [#allocation3], %s117
          %s119 = sand.u32 %s27, 1
          %s120 = smul.addr %s119, 1024
          %s121 = scalar_lea.vmem [#allocation2], %s120
          %s122 = smul.u32 16, %s17
          %s124 = ssub.s32 16384, 16384
          %125 = vsyncadd %s118, %s124
          %s126 = smul.addr %s122, 8
          %s127 = smul.addr %s126, 128
          %s128 = scalar_lea.hbm %s0, %s127
          %s129 = sshll.u32 %s121, 4
          %s130 = int_to_ptr.vmem [resolvable:$true] %s129
          %135 = dma.hbm_to_vmem [thread:$0]  %s128, 16384, %s130, %s118, 1024, 1024, 64
        $region20: #{tpu_custom_call.1} parent=15 // pred_fallthru
          _
        // Predicated region
        $region21: #{tpu_custom_call.1} parent=15 // pred_check
          %p136 = pneg %p63
        $region22: #{tpu_custom_call.1} parent=15 // pred_check_branch
          %138 = sbr.rel (%p136) target = $region24
        $region23: #{tpu_custom_call.1} parent=15 // pred_region
          %s139 = sand.u32 %s53, 1
          %s140 = scalar_lea.sflag [#allocation6], %s139
          %s141 = sand.u32 %s53, 1
          %s142 = smul.addr %s141, 256
          %s143 = scalar_lea.vmem [#allocation5], %s142
          %s144 = smul.u32 4, %s17
          %s146 = ssub.s32 4096, 4096
          %147 = vsyncadd %s140, %s146
          %s148 = smul.addr %s144, 8
          %s149 = smul.addr %s148, 128
          %s150 = scalar_lea.hbm %s1, %s149
          %s151 = sshll.u32 %s143, 4
          %s152 = int_to_ptr.vmem [resolvable:$true] %s151
          %157 = dma.hbm_to_vmem [thread:$0]  %s150, 4096, %s152, %s140, 1024, 1024, 64
        $region24: #{tpu_custom_call.1} parent=15 // pred_fallthru
          _
      $region16: #{tpu_custom_call.1} parent=5 // pred_fallthru
        _
      %p158 = scmp.le.s32.totalorder 1, %s17
      %p159 = scmp.lt.s32.totalorder %s17, 3
      %p160 = pnand %p158, %p159
      %p161 = pneg %p160
      // Predicated region
      $region25: #{tpu_custom_call.1} parent=5 // pred_check
        _
      $region26: #{tpu_custom_call.1} parent=5 // pred_check_branch
        %163 = sbr.rel (%p160) target = $region28
      $region27: #{tpu_custom_call.1} parent=5 // pred_region
        %s164 = ssub.s32 %s17, 1
        %s165 = sand.u32 %s30, 1
        %s166 = scalar_lea.sflag [#allocation3], %s165
        %s167 = sand.u32 %s30, 1
        %s168 = smul.addr %s167, 1024
        %s169 = scalar_lea.vmem [#allocation2], %s168
        // Predicated region
        $region29: #{tpu_custom_call.1} parent=27 // pred_check
          %p170 = pneg %p43
        $region30: #{tpu_custom_call.1} parent=27 // pred_check_branch
          %172 = sbr.rel (%p170) target = $region32
        $region31: #{tpu_custom_call.1} parent=27 // pred_region
          %173 = dma.done %s166, 16384
        $region32: #{tpu_custom_call.1} parent=27 // pred_fallthru
          _
        %s174 = sand.u32 %s56, 1
        %s175 = scalar_lea.sflag [#allocation6], %s174
        %s176 = sand.u32 %s56, 1
        %s177 = smul.addr %s176, 256
        %s178 = scalar_lea.vmem [#allocation5], %s177
        // Predicated region
        $region33: #{tpu_custom_call.1} parent=27 // pred_check
          %p179 = pneg %p69
        $region34: #{tpu_custom_call.1} parent=27 // pred_check_branch
          %181 = sbr.rel (%p179) target = $region36
        $region35: #{tpu_custom_call.1} parent=27 // pred_region
          %182 = dma.done %s175, 4096
        $region36: #{tpu_custom_call.1} parent=27 // pred_fallthru
          _
        %s183 = sand.u32 %s30, 1
        %s184 = scalar_lea.sflag [#allocation3], %s183
        %s185 = sand.u32 %s30, 1
        %s186 = smul.addr %s185, 1024
        %s187 = scalar_lea.vmem [#allocation2], %s186
        %p188 = pneg %p43
        %p189 = pneg %p40
        %s190 = sand.u32 %s56, 1
        %s191 = scalar_lea.sflag [#allocation6], %s190
        %s192 = sand.u32 %s56, 1
        %s193 = smul.addr %s192, 256
        %s194 = scalar_lea.vmem [#allocation5], %s193
        %p195 = pneg %p69
        %p196 = pneg %p66
        %p197 = pneg %p95
        %p198 = pneg %p92
        %s199 = sand.u32 %s82, 1
        %s200 = scalar_lea.sflag [#allocation4], %s199
        %s201 = sand.u32 %s82, 1
        %s202 = smul.addr %s201, 1024
        %s203 = scalar_lea.vmem [#allocation7], %s202
        %s204 = smul.u32 16, %s22
        %s205 = smul.u32 4, %s22
        %s206 = smul.u32 16, %s22
        %v207 = vld [vmem:[%s169] sm:$0xff]
        %v208 = vld [vmem:[%s169 + $0x8] sm:$0xff]
        %v209 = vld [vmem:[%s169 + $0x10] sm:$0xff]
        %v210 = vld [vmem:[%s169 + $0x18] sm:$0xff]
        %v211 = vld [vmem:[%s169 + $0x20] sm:$0xff]
        %v212 = vld [vmem:[%s169 + $0x28] sm:$0xff]
        %v213 = vld [vmem:[%s169 + $0x30] sm:$0xff]
        %v214 = vld [vmem:[%s169 + $0x38] sm:$0xff]
        %v215 = vld [vmem:[%s169 + $0x40] sm:$0xff]
        %v216 = vld [vmem:[%s169 + $0x48] sm:$0xff]
        %v217 = vld [vmem:[%s169 + $0x50] sm:$0xff]
        %v218 = vld [vmem:[%s169 + $0x58] sm:$0xff]
        %v219 = vld [vmem:[%s169 + $0x60] sm:$0xff]
        %v220 = vld [vmem:[%s169 + $0x68] sm:$0xff]
        %v221 = vld [vmem:[%s169 + $0x70] sm:$0xff]
        %v222 = vld [vmem:[%s169 + $0x78] sm:$0xff]
        %v223 = vld [vmem:[%s169 + $0x80] sm:$0xff]
        %v224 = vld [vmem:[%s169 + $0x88] sm:$0xff]
        %v225 = vld [vmem:[%s169 + $0x90] sm:$0xff]
        %v226 = vld [vmem:[%s169 + $0x98] sm:$0xff]
        %v227 = vld [vmem:[%s169 + $0xa0] sm:$0xff]
        %v228 = vld [vmem:[%s169 + $0xa8] sm:$0xff]
        %v229 = vld [vmem:[%s169 + $0xb0] sm:$0xff]
        %v230 = vld [vmem:[%s169 + $0xb8] sm:$0xff]
        %v231 = vld [vmem:[%s169 + $0xc0] sm:$0xff]
        %v232 = vld [vmem:[%s169 + $0xc8] sm:$0xff]
        %v233 = vld [vmem:[%s169 + $0xd0] sm:$0xff]
        %v234 = vld [vmem:[%s169 + $0xd8] sm:$0xff]
        %v235 = vld [vmem:[%s169 + $0xe0] sm:$0xff]
        %v236 = vld [vmem:[%s169 + $0xe8] sm:$0xff]
        %v237 = vld [vmem:[%s169 + $0xf0] sm:$0xff]
        %v238 = vld [vmem:[%s169 + $0xf8] sm:$0xff]
        %v239 = vld [vmem:[%s169 + $0x100] sm:$0xff]
        %v240 = vld [vmem:[%s169 + $0x108] sm:$0xff]
        %v241 = vld [vmem:[%s169 + $0x110] sm:$0xff]
        %v242 = vld [vmem:[%s169 + $0x118] sm:$0xff]
        %v243 = vld [vmem:[%s169 + $0x120] sm:$0xff]
        %v244 = vld [vmem:[%s169 + $0x128] sm:$0xff]
        %v245 = vld [vmem:[%s169 + $0x130] sm:$0xff]
        %v246 = vld [vmem:[%s169 + $0x138] sm:$0xff]
        %v247 = vld [vmem:[%s169 + $0x140] sm:$0xff]
        %v248 = vld [vmem:[%s169 + $0x148] sm:$0xff]
        %v249 = vld [vmem:[%s169 + $0x150] sm:$0xff]
        %v250 = vld [vmem:[%s169 + $0x158] sm:$0xff]
        %v251 = vld [vmem:[%s169 + $0x160] sm:$0xff]
        %v252 = vld [vmem:[%s169 + $0x168] sm:$0xff]
        %v253 = vld [vmem:[%s169 + $0x170] sm:$0xff]
        %v254 = vld [vmem:[%s169 + $0x178] sm:$0xff]
        %v255 = vld [vmem:[%s169 + $0x180] sm:$0xff]
        %v256 = vld [vmem:[%s169 + $0x188] sm:$0xff]
        %v257 = vld [vmem:[%s169 + $0x190] sm:$0xff]
        %v258 = vld [vmem:[%s169 + $0x198] sm:$0xff]
        %v259 = vld [vmem:[%s169 + $0x1a0] sm:$0xff]
        %v260 = vld [vmem:[%s169 + $0x1a8] sm:$0xff]
        %v261 = vld [vmem:[%s169 + $0x1b0] sm:$0xff]
        %v262 = vld [vmem:[%s169 + $0x1b8] sm:$0xff]
        %v263 = vld [vmem:[%s169 + $0x1c0] sm:$0xff]
        %v264 = vld [vmem:[%s169 + $0x1c8] sm:$0xff]
        %v265 = vld [vmem:[%s169 + $0x1d0] sm:$0xff]
        %v266 = vld [vmem:[%s169 + $0x1d8] sm:$0xff]
        %v267 = vld [vmem:[%s169 + $0x1e0] sm:$0xff]
        %v268 = vld [vmem:[%s169 + $0x1e8] sm:$0xff]
        %v269 = vld [vmem:[%s169 + $0x1f0] sm:$0xff]
        %v270 = vld [vmem:[%s169 + $0x1f8] sm:$0xff]
        %v271 = vld [vmem:[%s169 + $0x200] sm:$0xff]
        %v272 = vld [vmem:[%s169 + $0x208] sm:$0xff]
        %v273 = vld [vmem:[%s169 + $0x210] sm:$0xff]
        %v274 = vld [vmem:[%s169 + $0x218] sm:$0xff]
        %v275 = vld [vmem:[%s169 + $0x220] sm:$0xff]
        %v276 = vld [vmem:[%s169 + $0x228] sm:$0xff]
        %v277 = vld [vmem:[%s169 + $0x230] sm:$0xff]
        %v278 = vld [vmem:[%s169 + $0x238] sm:$0xff]
        %v279 = vld [vmem:[%s169 + $0x240] sm:$0xff]
        %v280 = vld [vmem:[%s169 + $0x248] sm:$0xff]
        %v281 = vld [vmem:[%s169 + $0x250] sm:$0xff]
        %v282 = vld [vmem:[%s169 + $0x258] sm:$0xff]
        %v283 = vld [vmem:[%s169 + $0x260] sm:$0xff]
        %v284 = vld [vmem:[%s169 + $0x268] sm:$0xff]
        %v285 = vld [vmem:[%s169 + $0x270] sm:$0xff]
        %v286 = vld [vmem:[%s169 + $0x278] sm:$0xff]
        %v287 = vld [vmem:[%s169 + $0x280] sm:$0xff]
        %v288 = vld [vmem:[%s169 + $0x288] sm:$0xff]
        %v289 = vld [vmem:[%s169 + $0x290] sm:$0xff]
        %v290 = vld [vmem:[%s169 + $0x298] sm:$0xff]
        %v291 = vld [vmem:[%s169 + $0x2a0] sm:$0xff]
        %v292 = vld [vmem:[%s169 + $0x2a8] sm:$0xff]
        %v293 = vld [vmem:[%s169 + $0x2b0] sm:$0xff]
        %v294 = vld [vmem:[%s169 + $0x2b8] sm:$0xff]
        %v295 = vld [vmem:[%s169 + $0x2c0] sm:$0xff]
        %v296 = vld [vmem:[%s169 + $0x2c8] sm:$0xff]
        %v297 = vld [vmem:[%s169 + $0x2d0] sm:$0xff]
        %v298 = vld [vmem:[%s169 + $0x2d8] sm:$0xff]
        %v299 = vld [vmem:[%s169 + $0x2e0] sm:$0xff]
        %v300 = vld [vmem:[%s169 + $0x2e8] sm:$0xff]
        %v301 = vld [vmem:[%s169 + $0x2f0] sm:$0xff]
        %v302 = vld [vmem:[%s169 + $0x2f8] sm:$0xff]
        %v303 = vld [vmem:[%s169 + $0x300] sm:$0xff]
        %v304 = vld [vmem:[%s169 + $0x308] sm:$0xff]
        %v305 = vld [vmem:[%s169 + $0x310] sm:$0xff]
        %v306 = vld [vmem:[%s169 + $0x318] sm:$0xff]
        %v307 = vld [vmem:[%s169 + $0x320] sm:$0xff]
        %v308 = vld [vmem:[%s169 + $0x328] sm:$0xff]
        %v309 = vld [vmem:[%s169 + $0x330] sm:$0xff]
        %v310 = vld [vmem:[%s169 + $0x338] sm:$0xff]
        %v311 = vld [vmem:[%s169 + $0x340] sm:$0xff]
        %v312 = vld [vmem:[%s169 + $0x348] sm:$0xff]
        %v313 = vld [vmem:[%s169 + $0x350] sm:$0xff]
        %v314 = vld [vmem:[%s169 + $0x358] sm:$0xff]
        %v315 = vld [vmem:[%s169 + $0x360] sm:$0xff]
        %v316 = vld [vmem:[%s169 + $0x368] sm:$0xff]
        %v317 = vld [vmem:[%s169 + $0x370] sm:$0xff]
        %v318 = vld [vmem:[%s169 + $0x378] sm:$0xff]
        %v319 = vld [vmem:[%s169 + $0x380] sm:$0xff]
        %v320 = vld [vmem:[%s169 + $0x388] sm:$0xff]
        %v321 = vld [vmem:[%s169 + $0x390] sm:$0xff]
        %v322 = vld [vmem:[%s169 + $0x398] sm:$0xff]
        %v323 = vld [vmem:[%s169 + $0x3a0] sm:$0xff]
        %v324 = vld [vmem:[%s169 + $0x3a8] sm:$0xff]
        %v325 = vld [vmem:[%s169 + $0x3b0] sm:$0xff]
        %v326 = vld [vmem:[%s169 + $0x3b8] sm:$0xff]
        %v327 = vld [vmem:[%s169 + $0x3c0] sm:$0xff]
        %v328 = vld [vmem:[%s169 + $0x3c8] sm:$0xff]
        %v329 = vld [vmem:[%s169 + $0x3d0] sm:$0xff]
        %v330 = vld [vmem:[%s169 + $0x3d8] sm:$0xff]
        %v331 = vld [vmem:[%s169 + $0x3e0] sm:$0xff]
        %v332 = vld [vmem:[%s169 + $0x3e8] sm:$0xff]
        %v333 = vld [vmem:[%s169 + $0x3f0] sm:$0xff]
        %v334 = vld [vmem:[%s169 + $0x3f8] sm:$0xff]
        %v335 = vld [vmem:[%s178] sm:$0xff]
        %v336 = vld [vmem:[%s178 + $0x8] sm:$0xff]
        %v337 = vld [vmem:[%s178 + $0x10] sm:$0xff]
        %v338 = vld [vmem:[%s178 + $0x18] sm:$0xff]
        %v339 = vld [vmem:[%s178 + $0x20] sm:$0xff]
        %v340 = vld [vmem:[%s178 + $0x28] sm:$0xff]
        %v341 = vld [vmem:[%s178 + $0x30] sm:$0xff]
        %v342 = vld [vmem:[%s178 + $0x38] sm:$0xff]
        %v343 = vld [vmem:[%s178 + $0x40] sm:$0xff]
        %v344 = vld [vmem:[%s178 + $0x48] sm:$0xff]
        %v345 = vld [vmem:[%s178 + $0x50] sm:$0xff]
        %v346 = vld [vmem:[%s178 + $0x58] sm:$0xff]
        %v347 = vld [vmem:[%s178 + $0x60] sm:$0xff]
        %v348 = vld [vmem:[%s178 + $0x68] sm:$0xff]
        %v349 = vld [vmem:[%s178 + $0x70] sm:$0xff]
        %v350 = vld [vmem:[%s178 + $0x78] sm:$0xff]
        %v351 = vld [vmem:[%s178 + $0x80] sm:$0xff]
        %v352 = vld [vmem:[%s178 + $0x88] sm:$0xff]
        %v353 = vld [vmem:[%s178 + $0x90] sm:$0xff]
        %v354 = vld [vmem:[%s178 + $0x98] sm:$0xff]
        %v355 = vld [vmem:[%s178 + $0xa0] sm:$0xff]
        %v356 = vld [vmem:[%s178 + $0xa8] sm:$0xff]
        %v357 = vld [vmem:[%s178 + $0xb0] sm:$0xff]
        %v358 = vld [vmem:[%s178 + $0xb8] sm:$0xff]
        %v359 = vld [vmem:[%s178 + $0xc0] sm:$0xff]
        %v360 = vld [vmem:[%s178 + $0xc8] sm:$0xff]
        %v361 = vld [vmem:[%s178 + $0xd0] sm:$0xff]
        %v362 = vld [vmem:[%s178 + $0xd8] sm:$0xff]
        %v363 = vld [vmem:[%s178 + $0xe0] sm:$0xff]
        %v364 = vld [vmem:[%s178 + $0xe8] sm:$0xff]
        %v365 = vld [vmem:[%s178 + $0xf0] sm:$0xff]
        %v366 = vld [vmem:[%s178 + $0xf8] sm:$0xff]
        %v367 = vunpack.c.0.s8 %v335
        %v368 = vunpack.c.0.s8 %v336
        %v369 = vunpack.c.0.s8 %v337
        %v370 = vunpack.c.0.s8 %v338
        %v371 = vunpack.c.0.s8 %v339
        %v372 = vunpack.c.0.s8 %v340
        %v373 = vunpack.c.0.s8 %v341
        %v374 = vunpack.c.0.s8 %v342
        %v375 = vunpack.c.1.s8 %v335
        %v376 = vunpack.c.1.s8 %v336
        %v377 = vunpack.c.1.s8 %v337
        %v378 = vunpack.c.1.s8 %v338
        %v379 = vunpack.c.1.s8 %v339
        %v380 = vunpack.c.1.s8 %v340
        %v381 = vunpack.c.1.s8 %v341
        %v382 = vunpack.c.1.s8 %v342
        %v383 = vunpack.c.2.s8 %v335
        %v384 = vunpack.c.2.s8 %v336
        %v385 = vunpack.c.2.s8 %v337
        %v386 = vunpack.c.2.s8 %v338
        %v387 = vunpack.c.2.s8 %v339
        %v388 = vunpack.c.2.s8 %v340
        %v389 = vunpack.c.2.s8 %v341
        %v390 = vunpack.c.2.s8 %v342
        %v391 = vunpack.c.3.s8 %v335
        %v392 = vunpack.c.3.s8 %v336
        %v393 = vunpack.c.3.s8 %v337
        %v394 = vunpack.c.3.s8 %v338
        %v395 = vunpack.c.3.s8 %v339
        %v396 = vunpack.c.3.s8 %v340
        %v397 = vunpack.c.3.s8 %v341
        %v398 = vunpack.c.3.s8 %v342
        %v399 = vunpack.c.0.s8 %v343
        %v400 = vunpack.c.0.s8 %v344
        %v401 = vunpack.c.0.s8 %v345
        %v402 = vunpack.c.0.s8 %v346
        %v403 = vunpack.c.0.s8 %v347
        %v404 = vunpack.c.0.s8 %v348
        %v405 = vunpack.c.0.s8 %v349
        %v406 = vunpack.c.0.s8 %v350
        %v407 = vunpack.c.1.s8 %v343
        %v408 = vunpack.c.1.s8 %v344
        %v409 = vunpack.c.1.s8 %v345
        %v410 = vunpack.c.1.s8 %v346
        %v411 = vunpack.c.1.s8 %v347
        %v412 = vunpack.c.1.s8 %v348
        %v413 = vunpack.c.1.s8 %v349
        %v414 = vunpack.c.1.s8 %v350
        %v415 = vunpack.c.2.s8 %v343
        %v416 = vunpack.c.2.s8 %v344
        %v417 = vunpack.c.2.s8 %v345
        %v418 = vunpack.c.2.s8 %v346
        %v419 = vunpack.c.2.s8 %v347
        %v420 = vunpack.c.2.s8 %v348
        %v421 = vunpack.c.2.s8 %v349
        %v422 = vunpack.c.2.s8 %v350
        %v423 = vunpack.c.3.s8 %v343
        %v424 = vunpack.c.3.s8 %v344
        %v425 = vunpack.c.3.s8 %v345
        %v426 = vunpack.c.3.s8 %v346
        %v427 = vunpack.c.3.s8 %v347
        %v428 = vunpack.c.3.s8 %v348
        %v429 = vunpack.c.3.s8 %v349
        %v430 = vunpack.c.3.s8 %v350
        %v431 = vunpack.c.0.s8 %v351
        %v432 = vunpack.c.0.s8 %v352
        %v433 = vunpack.c.0.s8 %v353
        %v434 = vunpack.c.0.s8 %v354
        %v435 = vunpack.c.0.s8 %v355
        %v436 = vunpack.c.0.s8 %v356
        %v437 = vunpack.c.0.s8 %v357
        %v438 = vunpack.c.0.s8 %v358
        %v439 = vunpack.c.1.s8 %v351
        %v440 = vunpack.c.1.s8 %v352
        %v441 = vunpack.c.1.s8 %v353
        %v442 = vunpack.c.1.s8 %v354
        %v443 = vunpack.c.1.s8 %v355
        %v444 = vunpack.c.1.s8 %v356
        %v445 = vunpack.c.1.s8 %v357
        %v446 = vunpack.c.1.s8 %v358
        %v447 = vunpack.c.2.s8 %v351
        %v448 = vunpack.c.2.s8 %v352
        %v449 = vunpack.c.2.s8 %v353
        %v450 = vunpack.c.2.s8 %v354
        %v451 = vunpack.c.2.s8 %v355
        %v452 = vunpack.c.2.s8 %v356
        %v453 = vunpack.c.2.s8 %v357
        %v454 = vunpack.c.2.s8 %v358
        %v455 = vunpack.c.3.s8 %v351
        %v456 = vunpack.c.3.s8 %v352
        %v457 = vunpack.c.3.s8 %v353
        %v458 = vunpack.c.3.s8 %v354
        %v459 = vunpack.c.3.s8 %v355
        %v460 = vunpack.c.3.s8 %v356
        %v461 = vunpack.c.3.s8 %v357
        %v462 = vunpack.c.3.s8 %v358
        %v463 = vunpack.c.0.s8 %v359
        %v464 = vunpack.c.0.s8 %v360
        %v465 = vunpack.c.0.s8 %v361
        %v466 = vunpack.c.0.s8 %v362
        %v467 = vunpack.c.0.s8 %v363
        %v468 = vunpack.c.0.s8 %v364
        %v469 = vunpack.c.0.s8 %v365
        %v470 = vunpack.c.0.s8 %v366
        %v471 = vunpack.c.1.s8 %v359
        %v472 = vunpack.c.1.s8 %v360
        %v473 = vunpack.c.1.s8 %v361
        %v474 = vunpack.c.1.s8 %v362
        %v475 = vunpack.c.1.s8 %v363
        %v476 = vunpack.c.1.s8 %v364
        %v477 = vunpack.c.1.s8 %v365
        %v478 = vunpack.c.1.s8 %v366
        %v479 = vunpack.c.2.s8 %v359
        %v480 = vunpack.c.2.s8 %v360
        %v481 = vunpack.c.2.s8 %v361
        %v482 = vunpack.c.2.s8 %v362
        %v483 = vunpack.c.2.s8 %v363
        %v484 = vunpack.c.2.s8 %v364
        %v485 = vunpack.c.2.s8 %v365
        %v486 = vunpack.c.2.s8 %v366
        %v487 = vunpack.c.3.s8 %v359
        %v488 = vunpack.c.3.s8 %v360
        %v489 = vunpack.c.3.s8 %v361
        %v490 = vunpack.c.3.s8 %v362
        %v491 = vunpack.c.3.s8 %v363
        %v492 = vunpack.c.3.s8 %v364
        %v493 = vunpack.c.3.s8 %v365
        %v494 = vunpack.c.3.s8 %v366
        %v495 = vcvt.s32.f32 %v367
        %v496 = vcvt.s32.f32 %v368
        %v497 = vcvt.s32.f32 %v369
        %v498 = vcvt.s32.f32 %v370
        %v499 = vcvt.s32.f32 %v371
        %v500 = vcvt.s32.f32 %v372
        %v501 = vcvt.s32.f32 %v373
        %v502 = vcvt.s32.f32 %v374
        %v503 = vcvt.s32.f32 %v375
        %v504 = vcvt.s32.f32 %v376
        %v505 = vcvt.s32.f32 %v377
        %v506 = vcvt.s32.f32 %v378
        %v507 = vcvt.s32.f32 %v379
        %v508 = vcvt.s32.f32 %v380
        %v509 = vcvt.s32.f32 %v381
        %v510 = vcvt.s32.f32 %v382
        %v511 = vcvt.s32.f32 %v383
        %v512 = vcvt.s32.f32 %v384
        %v513 = vcvt.s32.f32 %v385
        %v514 = vcvt.s32.f32 %v386
        %v515 = vcvt.s32.f32 %v387
        %v516 = vcvt.s32.f32 %v388
        %v517 = vcvt.s32.f32 %v389
        %v518 = vcvt.s32.f32 %v390
        %v519 = vcvt.s32.f32 %v391
        %v520 = vcvt.s32.f32 %v392
        %v521 = vcvt.s32.f32 %v393
        %v522 = vcvt.s32.f32 %v394
        %v523 = vcvt.s32.f32 %v395
        %v524 = vcvt.s32.f32 %v396
        %v525 = vcvt.s32.f32 %v397
        %v526 = vcvt.s32.f32 %v398
        %v527 = vcvt.s32.f32 %v399
        %v528 = vcvt.s32.f32 %v400
        %v529 = vcvt.s32.f32 %v401
        %v530 = vcvt.s32.f32 %v402
        %v531 = vcvt.s32.f32 %v403
        %v532 = vcvt.s32.f32 %v404
        %v533 = vcvt.s32.f32 %v405
        %v534 = vcvt.s32.f32 %v406
        %v535 = vcvt.s32.f32 %v407
        %v536 = vcvt.s32.f32 %v408
        %v537 = vcvt.s32.f32 %v409
        %v538 = vcvt.s32.f32 %v410
        %v539 = vcvt.s32.f32 %v411
        %v540 = vcvt.s32.f32 %v412
        %v541 = vcvt.s32.f32 %v413
        %v542 = vcvt.s32.f32 %v414
        %v543 = vcvt.s32.f32 %v415
        %v544 = vcvt.s32.f32 %v416
        %v545 = vcvt.s32.f32 %v417
        %v546 = vcvt.s32.f32 %v418
        %v547 = vcvt.s32.f32 %v419
        %v548 = vcvt.s32.f32 %v420
        %v549 = vcvt.s32.f32 %v421
        %v550 = vcvt.s32.f32 %v422
        %v551 = vcvt.s32.f32 %v423
        %v552 = vcvt.s32.f32 %v424
        %v553 = vcvt.s32.f32 %v425
        %v554 = vcvt.s32.f32 %v426
        %v555 = vcvt.s32.f32 %v427
        %v556 = vcvt.s32.f32 %v428
        %v557 = vcvt.s32.f32 %v429
        %v558 = vcvt.s32.f32 %v430
        %v559 = vcvt.s32.f32 %v431
        %v560 = vcvt.s32.f32 %v432
        %v561 = vcvt.s32.f32 %v433
        %v562 = vcvt.s32.f32 %v434
        %v563 = vcvt.s32.f32 %v435
        %v564 = vcvt.s32.f32 %v436
        %v565 = vcvt.s32.f32 %v437
        %v566 = vcvt.s32.f32 %v438
        %v567 = vcvt.s32.f32 %v439
        %v568 = vcvt.s32.f32 %v440
        %v569 = vcvt.s32.f32 %v441
        %v570 = vcvt.s32.f32 %v442
        %v571 = vcvt.s32.f32 %v443
        %v572 = vcvt.s32.f32 %v444
        %v573 = vcvt.s32.f32 %v445
        %v574 = vcvt.s32.f32 %v446
        %v575 = vcvt.s32.f32 %v447
        %v576 = vcvt.s32.f32 %v448
        %v577 = vcvt.s32.f32 %v449
        %v578 = vcvt.s32.f32 %v450
        %v579 = vcvt.s32.f32 %v451
        %v580 = vcvt.s32.f32 %v452
        %v581 = vcvt.s32.f32 %v453
        %v582 = vcvt.s32.f32 %v454
        %v583 = vcvt.s32.f32 %v455
        %v584 = vcvt.s32.f32 %v456
        %v585 = vcvt.s32.f32 %v457
        %v586 = vcvt.s32.f32 %v458
        %v587 = vcvt.s32.f32 %v459
        %v588 = vcvt.s32.f32 %v460
        %v589 = vcvt.s32.f32 %v461
        %v590 = vcvt.s32.f32 %v462
        %v591 = vcvt.s32.f32 %v463
        %v592 = vcvt.s32.f32 %v464
        %v593 = vcvt.s32.f32 %v465
        %v594 = vcvt.s32.f32 %v466
        %v595 = vcvt.s32.f32 %v467
        %v596 = vcvt.s32.f32 %v468
        %v597 = vcvt.s32.f32 %v469
        %v598 = vcvt.s32.f32 %v470
        %v599 = vcvt.s32.f32 %v471
        %v600 = vcvt.s32.f32 %v472
        %v601 = vcvt.s32.f32 %v473
        %v602 = vcvt.s32.f32 %v474
        %v603 = vcvt.s32.f32 %v475
        %v604 = vcvt.s32.f32 %v476
        %v605 = vcvt.s32.f32 %v477
        %v606 = vcvt.s32.f32 %v478
        %v607 = vcvt.s32.f32 %v479
        %v608 = vcvt.s32.f32 %v480
        %v609 = vcvt.s32.f32 %v481
        %v610 = vcvt.s32.f32 %v482
        %v611 = vcvt.s32.f32 %v483
        %v612 = vcvt.s32.f32 %v484
        %v613 = vcvt.s32.f32 %v485
        %v614 = vcvt.s32.f32 %v486
        %v615 = vcvt.s32.f32 %v487
        %v616 = vcvt.s32.f32 %v488
        %v617 = vcvt.s32.f32 %v489
        %v618 = vcvt.s32.f32 %v490
        %v619 = vcvt.s32.f32 %v491
        %v620 = vcvt.s32.f32 %v492
        %v621 = vcvt.s32.f32 %v493
        %v622 = vcvt.s32.f32 %v494
        %v623 = vmul.f32 %v207, %v495
        %v624 = vmul.f32 %v208, %v496
        %v625 = vmul.f32 %v209, %v497
        %v626 = vmul.f32 %v210, %v498
        %v627 = vmul.f32 %v211, %v499
        %v628 = vmul.f32 %v212, %v500
        %v629 = vmul.f32 %v213, %v501
        %v630 = vmul.f32 %v214, %v502
        %v631 = vmul.f32 %v215, %v503
        %v632 = vmul.f32 %v216, %v504
        %v633 = vmul.f32 %v217, %v505
        %v634 = vmul.f32 %v218, %v506
        %v635 = vmul.f32 %v219, %v507
        %v636 = vmul.f32 %v220, %v508
        %v637 = vmul.f32 %v221, %v509
        %v638 = vmul.f32 %v222, %v510
        %v639 = vmul.f32 %v223, %v511
        %v640 = vmul.f32 %v224, %v512
        %v641 = vmul.f32 %v225, %v513
        %v642 = vmul.f32 %v226, %v514
        %v643 = vmul.f32 %v227, %v515
        %v644 = vmul.f32 %v228, %v516
        %v645 = vmul.f32 %v229, %v517
        %v646 = vmul.f32 %v230, %v518
        %v647 = vmul.f32 %v231, %v519
        %v648 = vmul.f32 %v232, %v520
        %v649 = vmul.f32 %v233, %v521
        %v650 = vmul.f32 %v234, %v522
        %v651 = vmul.f32 %v235, %v523
        %v652 = vmul.f32 %v236, %v524
        %v653 = vmul.f32 %v237, %v525
        %v654 = vmul.f32 %v238, %v526
        %v655 = vmul.f32 %v239, %v527
        %v656 = vmul.f32 %v240, %v528
        %v657 = vmul.f32 %v241, %v529
        %v658 = vmul.f32 %v242, %v530
        %v659 = vmul.f32 %v243, %v531
        %v660 = vmul.f32 %v244, %v532
        %v661 = vmul.f32 %v245, %v533
        %v662 = vmul.f32 %v246, %v534
        %v663 = vmul.f32 %v247, %v535
        %v664 = vmul.f32 %v248, %v536
        %v665 = vmul.f32 %v249, %v537
        %v666 = vmul.f32 %v250, %v538
        %v667 = vmul.f32 %v251, %v539
        %v668 = vmul.f32 %v252, %v540
        %v669 = vmul.f32 %v253, %v541
        %v670 = vmul.f32 %v254, %v542
        %v671 = vmul.f32 %v255, %v543
        %v672 = vmul.f32 %v256, %v544
        %v673 = vmul.f32 %v257, %v545
        %v674 = vmul.f32 %v258, %v546
        %v675 = vmul.f32 %v259, %v547
        %v676 = vmul.f32 %v260, %v548
        %v677 = vmul.f32 %v261, %v549
        %v678 = vmul.f32 %v262, %v550
        %v679 = vmul.f32 %v263, %v551
        %v680 = vmul.f32 %v264, %v552
        %v681 = vmul.f32 %v265, %v553
        %v682 = vmul.f32 %v266, %v554
        %v683 = vmul.f32 %v267, %v555
        %v684 = vmul.f32 %v268, %v556
        %v685 = vmul.f32 %v269, %v557
        %v686 = vmul.f32 %v270, %v558
        %v687 = vmul.f32 %v271, %v559
        %v688 = vmul.f32 %v272, %v560
        %v689 = vmul.f32 %v273, %v561
        %v690 = vmul.f32 %v274, %v562
        %v691 = vmul.f32 %v275, %v563
        %v692 = vmul.f32 %v276, %v564
        %v693 = vmul.f32 %v277, %v565
        %v694 = vmul.f32 %v278, %v566
        %v695 = vmul.f32 %v279, %v567
        %v696 = vmul.f32 %v280, %v568
        %v697 = vmul.f32 %v281, %v569
        %v698 = vmul.f32 %v282, %v570
        %v699 = vmul.f32 %v283, %v571
        %v700 = vmul.f32 %v284, %v572
        %v701 = vmul.f32 %v285, %v573
        %v702 = vmul.f32 %v286, %v574
        %v703 = vmul.f32 %v287, %v575
        %v704 = vmul.f32 %v288, %v576
        %v705 = vmul.f32 %v289, %v577
        %v706 = vmul.f32 %v290, %v578
        %v707 = vmul.f32 %v291, %v579
        %v708 = vmul.f32 %v292, %v580
        %v709 = vmul.f32 %v293, %v581
        %v710 = vmul.f32 %v294, %v582
        %v711 = vmul.f32 %v295, %v583
        %v712 = vmul.f32 %v296, %v584
        %v713 = vmul.f32 %v297, %v585
        %v714 = vmul.f32 %v298, %v586
        %v715 = vmul.f32 %v299, %v587
        %v716 = vmul.f32 %v300, %v588
        %v717 = vmul.f32 %v301, %v589
        %v718 = vmul.f32 %v302, %v590
        %v719 = vmul.f32 %v303, %v591
        %v720 = vmul.f32 %v304, %v592
        %v721 = vmul.f32 %v305, %v593
        %v722 = vmul.f32 %v306, %v594
        %v723 = vmul.f32 %v307, %v595
        %v724 = vmul.f32 %v308, %v596
        %v725 = vmul.f32 %v309, %v597
        %v726 = vmul.f32 %v310, %v598
        %v727 = vmul.f32 %v311, %v599
        %v728 = vmul.f32 %v312, %v600
        %v729 = vmul.f32 %v313, %v601
        %v730 = vmul.f32 %v314, %v602
        %v731 = vmul.f32 %v315, %v603
        %v732 = vmul.f32 %v316, %v604
        %v733 = vmul.f32 %v317, %v605
        %v734 = vmul.f32 %v318, %v606
        %v735 = vmul.f32 %v319, %v607
        %v736 = vmul.f32 %v320, %v608
        %v737 = vmul.f32 %v321, %v609
        %v738 = vmul.f32 %v322, %v610
        %v739 = vmul.f32 %v323, %v611
        %v740 = vmul.f32 %v324, %v612
        %v741 = vmul.f32 %v325, %v613
        %v742 = vmul.f32 %v326, %v614
        %v743 = vmul.f32 %v327, %v615
        %v744 = vmul.f32 %v328, %v616
        %v745 = vmul.f32 %v329, %v617
        %v746 = vmul.f32 %v330, %v618
        %v747 = vmul.f32 %v331, %v619
        %v748 = vmul.f32 %v332, %v620
        %v749 = vmul.f32 %v333, %v621
        %v750 = vmul.f32 %v334, %v622
        %751 = vst [vmem:[%s203] sm:$0xff] %v623
        %752 = vst [vmem:[%s203 + $0x8] sm:$0xff] %v624
        %753 = vst [vmem:[%s203 + $0x10] sm:$0xff] %v625
        %754 = vst [vmem:[%s203 + $0x18] sm:$0xff] %v626
        %755 = vst [vmem:[%s203 + $0x20] sm:$0xff] %v627
        %756 = vst [vmem:[%s203 + $0x28] sm:$0xff] %v628
        %757 = vst [vmem:[%s203 + $0x30] sm:$0xff] %v629
        %758 = vst [vmem:[%s203 + $0x38] sm:$0xff] %v630
        %759 = vst [vmem:[%s203 + $0x40] sm:$0xff] %v631
        %760 = vst [vmem:[%s203 + $0x48] sm:$0xff] %v632
        %761 = vst [vmem:[%s203 + $0x50] sm:$0xff] %v633
        %762 = vst [vmem:[%s203 + $0x58] sm:$0xff] %v634
        %763 = vst [vmem:[%s203 + $0x60] sm:$0xff] %v635
        %764 = vst [vmem:[%s203 + $0x68] sm:$0xff] %v636
        %765 = vst [vmem:[%s203 + $0x70] sm:$0xff] %v637
        %766 = vst [vmem:[%s203 + $0x78] sm:$0xff] %v638
        %767 = vst [vmem:[%s203 + $0x80] sm:$0xff] %v639
        %768 = vst [vmem:[%s203 + $0x88] sm:$0xff] %v640
        %769 = vst [vmem:[%s203 + $0x90] sm:$0xff] %v641
        %770 = vst [vmem:[%s203 + $0x98] sm:$0xff] %v642
        %771 = vst [vmem:[%s203 + $0xa0] sm:$0xff] %v643
        %772 = vst [vmem:[%s203 + $0xa8] sm:$0xff] %v644
        %773 = vst [vmem:[%s203 + $0xb0] sm:$0xff] %v645
        %774 = vst [vmem:[%s203 + $0xb8] sm:$0xff] %v646
        %775 = vst [vmem:[%s203 + $0xc0] sm:$0xff] %v647
        %776 = vst [vmem:[%s203 + $0xc8] sm:$0xff] %v648
        %777 = vst [vmem:[%s203 + $0xd0] sm:$0xff] %v649
        %778 = vst [vmem:[%s203 + $0xd8] sm:$0xff] %v650
        %779 = vst [vmem:[%s203 + $0xe0] sm:$0xff] %v651
        %780 = vst [vmem:[%s203 + $0xe8] sm:$0xff] %v652
        %781 = vst [vmem:[%s203 + $0xf0] sm:$0xff] %v653
        %782 = vst [vmem:[%s203 + $0xf8] sm:$0xff] %v654
        %783 = vst [vmem:[%s203 + $0x100] sm:$0xff] %v655
        %784 = vst [vmem:[%s203 + $0x108] sm:$0xff] %v656
        %785 = vst [vmem:[%s203 + $0x110] sm:$0xff] %v657
        %786 = vst [vmem:[%s203 + $0x118] sm:$0xff] %v658
        %787 = vst [vmem:[%s203 + $0x120] sm:$0xff] %v659
        %788 = vst [vmem:[%s203 + $0x128] sm:$0xff] %v660
        %789 = vst [vmem:[%s203 + $0x130] sm:$0xff] %v661
        %790 = vst [vmem:[%s203 + $0x138] sm:$0xff] %v662
        %791 = vst [vmem:[%s203 + $0x140] sm:$0xff] %v663
        %792 = vst [vmem:[%s203 + $0x148] sm:$0xff] %v664
        %793 = vst [vmem:[%s203 + $0x150] sm:$0xff] %v665
        %794 = vst [vmem:[%s203 + $0x158] sm:$0xff] %v666
        %795 = vst [vmem:[%s203 + $0x160] sm:$0xff] %v667
        %796 = vst [vmem:[%s203 + $0x168] sm:$0xff] %v668
        %797 = vst [vmem:[%s203 + $0x170] sm:$0xff] %v669
        %798 = vst [vmem:[%s203 + $0x178] sm:$0xff] %v670
        %799 = vst [vmem:[%s203 + $0x180] sm:$0xff] %v671
        %800 = vst [vmem:[%s203 + $0x188] sm:$0xff] %v672
        %801 = vst [vmem:[%s203 + $0x190] sm:$0xff] %v673
        %802 = vst [vmem:[%s203 + $0x198] sm:$0xff] %v674
        %803 = vst [vmem:[%s203 + $0x1a0] sm:$0xff] %v675
        %804 = vst [vmem:[%s203 + $0x1a8] sm:$0xff] %v676
        %805 = vst [vmem:[%s203 + $0x1b0] sm:$0xff] %v677
        %806 = vst [vmem:[%s203 + $0x1b8] sm:$0xff] %v678
        %807 = vst [vmem:[%s203 + $0x1c0] sm:$0xff] %v679
        %808 = vst [vmem:[%s203 + $0x1c8] sm:$0xff] %v680
        %809 = vst [vmem:[%s203 + $0x1d0] sm:$0xff] %v681
        %810 = vst [vmem:[%s203 + $0x1d8] sm:$0xff] %v682
        %811 = vst [vmem:[%s203 + $0x1e0] sm:$0xff] %v683
        %812 = vst [vmem:[%s203 + $0x1e8] sm:$0xff] %v684
        %813 = vst [vmem:[%s203 + $0x1f0] sm:$0xff] %v685
        %814 = vst [vmem:[%s203 + $0x1f8] sm:$0xff] %v686
        %815 = vst [vmem:[%s203 + $0x200] sm:$0xff] %v687
        %816 = vst [vmem:[%s203 + $0x208] sm:$0xff] %v688
        %817 = vst [vmem:[%s203 + $0x210] sm:$0xff] %v689
        %818 = vst [vmem:[%s203 + $0x218] sm:$0xff] %v690
        %819 = vst [vmem:[%s203 + $0x220] sm:$0xff] %v691
        %820 = vst [vmem:[%s203 + $0x228] sm:$0xff] %v692
        %821 = vst [vmem:[%s203 + $0x230] sm:$0xff] %v693
        %822 = vst [vmem:[%s203 + $0x238] sm:$0xff] %v694
        %823 = vst [vmem:[%s203 + $0x240] sm:$0xff] %v695
        %824 = vst [vmem:[%s203 + $0x248] sm:$0xff] %v696
        %825 = vst [vmem:[%s203 + $0x250] sm:$0xff] %v697
        %826 = vst [vmem:[%s203 + $0x258] sm:$0xff] %v698
        %827 = vst [vmem:[%s203 + $0x260] sm:$0xff] %v699
        %828 = vst [vmem:[%s203 + $0x268] sm:$0xff] %v700
        %829 = vst [vmem:[%s203 + $0x270] sm:$0xff] %v701
        %830 = vst [vmem:[%s203 + $0x278] sm:$0xff] %v702
        %831 = vst [vmem:[%s203 + $0x280] sm:$0xff] %v703
        %832 = vst [vmem:[%s203 + $0x288] sm:$0xff] %v704
        %833 = vst [vmem:[%s203 + $0x290] sm:$0xff] %v705
        %834 = vst [vmem:[%s203 + $0x298] sm:$0xff] %v706
        %835 = vst [vmem:[%s203 + $0x2a0] sm:$0xff] %v707
        %836 = vst [vmem:[%s203 + $0x2a8] sm:$0xff] %v708
        %837 = vst [vmem:[%s203 + $0x2b0] sm:$0xff] %v709
        %838 = vst [vmem:[%s203 + $0x2b8] sm:$0xff] %v710
        %839 = vst [vmem:[%s203 + $0x2c0] sm:$0xff] %v711
        %840 = vst [vmem:[%s203 + $0x2c8] sm:$0xff] %v712
        %841 = vst [vmem:[%s203 + $0x2d0] sm:$0xff] %v713
        %842 = vst [vmem:[%s203 + $0x2d8] sm:$0xff] %v714
        %843 = vst [vmem:[%s203 + $0x2e0] sm:$0xff] %v715
        %844 = vst [vmem:[%s203 + $0x2e8] sm:$0xff] %v716
        %845 = vst [vmem:[%s203 + $0x2f0] sm:$0xff] %v717
        %846 = vst [vmem:[%s203 + $0x2f8] sm:$0xff] %v718
        %847 = vst [vmem:[%s203 + $0x300] sm:$0xff] %v719
        %848 = vst [vmem:[%s203 + $0x308] sm:$0xff] %v720
        %849 = vst [vmem:[%s203 + $0x310] sm:$0xff] %v721
        %850 = vst [vmem:[%s203 + $0x318] sm:$0xff] %v722
        %851 = vst [vmem:[%s203 + $0x320] sm:$0xff] %v723
        %852 = vst [vmem:[%s203 + $0x328] sm:$0xff] %v724
        %853 = vst [vmem:[%s203 + $0x330] sm:$0xff] %v725
        %854 = vst [vmem:[%s203 + $0x338] sm:$0xff] %v726
        %855 = vst [vmem:[%s203 + $0x340] sm:$0xff] %v727
        %856 = vst [vmem:[%s203 + $0x348] sm:$0xff] %v728
        %857 = vst [vmem:[%s203 + $0x350] sm:$0xff] %v729
        %858 = vst [vmem:[%s203 + $0x358] sm:$0xff] %v730
        %859 = vst [vmem:[%s203 + $0x360] sm:$0xff] %v731
        %860 = vst [vmem:[%s203 + $0x368] sm:$0xff] %v732
        %861 = vst [vmem:[%s203 + $0x370] sm:$0xff] %v733
        %862 = vst [vmem:[%s203 + $0x378] sm:$0xff] %v734
        %863 = vst [vmem:[%s203 + $0x380] sm:$0xff] %v735
        %864 = vst [vmem:[%s203 + $0x388] sm:$0xff] %v736
        %865 = vst [vmem:[%s203 + $0x390] sm:$0xff] %v737
        %866 = vst [vmem:[%s203 + $0x398] sm:$0xff] %v738
        %867 = vst [vmem:[%s203 + $0x3a0] sm:$0xff] %v739
        %868 = vst [vmem:[%s203 + $0x3a8] sm:$0xff] %v740
        %869 = vst [vmem:[%s203 + $0x3b0] sm:$0xff] %v741
        %870 = vst [vmem:[%s203 + $0x3b8] sm:$0xff] %v742
        %871 = vst [vmem:[%s203 + $0x3c0] sm:$0xff] %v743
        %872 = vst [vmem:[%s203 + $0x3c8] sm:$0xff] %v744
        %873 = vst [vmem:[%s203 + $0x3d0] sm:$0xff] %v745
        %874 = vst [vmem:[%s203 + $0x3d8] sm:$0xff] %v746
        %875 = vst [vmem:[%s203 + $0x3e0] sm:$0xff] %v747
        %876 = vst [vmem:[%s203 + $0x3e8] sm:$0xff] %v748
        %877 = vst [vmem:[%s203 + $0x3f0] sm:$0xff] %v749
        %878 = vst [vmem:[%s203 + $0x3f8] sm:$0xff] %v750
        %s879 = sand.u32 %s82, 1
        %s880 = scalar_lea.sflag [#allocation4], %s879
        %s881 = sand.u32 %s82, 1
        %s882 = smul.addr %s881, 1024
        %s883 = scalar_lea.vmem [#allocation7], %s882
        // Predicated region
        $region37: #{tpu_custom_call.1} parent=27 // pred_check
          %p884 = pneg %p92
        $region38: #{tpu_custom_call.1} parent=27 // pred_check_branch
          %886 = sbr.rel (%p884) target = $region40
        $region39: #{tpu_custom_call.1} parent=27 // pred_region
          %s887 = smul.u32 16, %s22
          %s889 = ssub.s32 16384, 16384
          %890 = vsyncadd %s880, %s889
          %s891 = smul.addr %s887, 8
          %s892 = smul.addr %s891, 128
          %s893 = scalar_lea.hbm %s2, %s892
          %s894 = sshll.u32 %s883, 4
          %s895 = int_to_ptr.vmem [resolvable:$true] %s894
          %900 = dma.vmem_to_hbm [thread:$0]  %s895, 16384, %s893, %s880, 1024, 1024, 64
        $region40: #{tpu_custom_call.1} parent=27 // pred_fallthru
          _
      $region28: #{tpu_custom_call.1} parent=5 // pred_fallthru
        _
      %p901 = scmp.le.s32.totalorder 2, %s17
      // Predicated region
      $region41: #{tpu_custom_call.1} parent=5 // pred_check
        %p902 = pneg %p901
      $region42: #{tpu_custom_call.1} parent=5 // pred_check_branch
        %904 = sbr.rel (%p902) target = $region44
      $region43: #{tpu_custom_call.1} parent=5 // pred_region
        %s905 = ssub.s32 %s17, 2
        // Predicated region
        $region45: #{tpu_custom_call.1} parent=43 // pred_check
          %p906 = pneg %p98
        $region46: #{tpu_custom_call.1} parent=43 // pred_check_branch
          %908 = sbr.rel (%p906) target = $region48
        $region47: #{tpu_custom_call.1} parent=43 // pred_region
          %s909 = sand.u32 %s83, 1
          %s910 = scalar_lea.sflag [#allocation4], %s909
          %s911 = sand.u32 %s83, 1
          %s912 = smul.addr %s911, 1024
          %s913 = scalar_lea.vmem [#allocation7], %s912
          %914 = dma.done %s910, 16384
        $region48: #{tpu_custom_call.1} parent=43 // pred_fallthru
          _
      $region44: #{tpu_custom_call.1} parent=5 // pred_fallthru
        _
    $region6: #{tpu_custom_call.1} parent=1 // loop_footer
      %s21 = sadd.s32 1, %s17
    $region7: #{tpu_custom_call.1} parent=1 // loop_footer_branch
      %16 = sbr.rel target = $region3
    $region8: #{tpu_custom_call.1} parent=1 // loop_exit
      _
    %915 = vsyncpa [#allocation3], 1
    %s916 = scalar_lea.sflag [#allocation3], 1
    %917 = vsyncpa %s916, 1
    %918 = vsyncpa [#allocation6], 1
    %s919 = scalar_lea.sflag [#allocation6], 1
    %920 = vsyncpa %s919, 1
    %921 = vsyncpa [#allocation4], 1
    %s922 = scalar_lea.sflag [#allocation4], 1
    %923 = vsyncpa %s922, 1

</llo_original>
